<compile_context>
chip_gen: v7x
topology: tpu7x:2x2x1
jax: 0.10.0
libtpu: 0.0.40
codegen_flags: <defaults>
</compile_context>

<pallas_src>
import math

import jax
import jax.numpy as jnp
import numpy as np
from jax.experimental import pallas as pl
from jax.experimental.pallas import tpu as pltpu


def _round_up(x, m):
    return (x + m - 1) // m * m


def _cdiv(a, b):
    return (a + b - 1) // b


def _convtr_kernel(x_ref, w_ref, b_ref, o_ref):
    """One (batch, Q-tile) grid cell: a single lane-dense MXU matmul + bias.

    x_ref: (P_TILE, W*C_in)      bf16  im2col'd input rows (window W = F+KQ-1, hop F)
    w_ref: (W*C_in, F*n_lanes)   bf16  block-banded folded taps
    b_ref: (1, F*n_lanes)        f32   bias tiled across residues / row folds
    o_ref: (P_TILE, F*n_lanes)   bf16  (stored once, full lane width)
    """
    acc = jnp.dot(x_ref[...], w_ref[...], preferred_element_type=jnp.float32)
    o_ref[...] = (acc + b_ref[...]).astype(o_ref.dtype)


def sconv_transpose1d(x, weight, bias, *, stride, causal=False, trim_right_ratio=1.0,
                      q_tile=1024, out_dtype=jnp.float32):
    """Forward of SConvTranspose1d (norm='none').

    x:      (B, C_in, L_in)   float32   (PyTorch NCL layout)
    weight: (C_in, C_out, K)  float32   (PyTorch ConvTranspose1d weight layout)
    bias:   (C_out,)          float32
    returns (B, C_out, L_out) with L_out = L_full - (K - stride), L_full = (L_in-1)*stride + K
    """
    assert causal or trim_right_ratio == 1.0
    assert 0.0 <= trim_right_ratio <= 1.0
    B, C_in, L_in = x.shape
    w_cin, C_out, K = weight.shape
    assert w_cin == C_in
    assert K >= stride >= 1, "SConvTranspose1d assumes kernel_size >= stride"

    KQ = (K - 1) // stride + 1           # ceil(K / stride): number of tap groups
    Q = L_in + KQ - 1                    # scatter rows before residue expansion / trim
    L_full = (L_in - 1) * stride + K     # raw ConvTranspose1d output length
    n_lanes = stride * C_out             # lanes per output row (residue-major, channel-minor)

    # Row-fold factor so the output lane axis is >= 128 wide (dense, unmasked stores).
    if n_lanes < 128 and 128 % n_lanes == 0:
        F = 128 // n_lanes
    else:
        F = 1
    FN = F * n_lanes                     # output lane width
    W = F + KQ - 1                       # im2col window (hop F)
    WC = W * C_in                        # contraction width

    # ---- Q tiling: balanced tiles, multiple of 16*F (bf16 sublane packing x row fold),
    # sized from a ~2 MiB bf16 output-tile budget so big layers stay VMEM-friendly. ------
    mult = 16 * F
    q_budget_rows = max((2 * 1024 * 1024) // (n_lanes * 2), mult)
    q_cap = max(mult, (min(q_tile, q_budget_rows) // mult) * mult)
    n_tiles = _cdiv(Q, q_cap)
    Q_TILE = _round_up(_cdiv(Q, n_tiles), mult)
    Q_pad = Q_TILE * n_tiles
    P_TILE = Q_TILE // F                 # matmul rows per tile
    P_pad = Q_pad // F
    NQ = n_tiles

    # ---- glue: channels-last bf16 input, zero pad, strided im2col (window W, hop F) ----
    x_lc = jnp.transpose(x, (0, 2, 1)).astype(jnp.bfloat16)             # (B, L_in, C_in)
    x_pad = jnp.pad(x_lc, ((0, 0), (KQ - 1, Q_pad - L_in), (0, 0)))     # (B, Q_pad+KQ-1, C_in)
    x_im2col = jnp.concatenate(
        [x_pad[:, s:s + Q_pad:F, :] for s in range(W)], axis=-1)        # (B, P_pad, W*C_in)

    # ---- glue: tap grouping + block-banded fold into a (W*C_in, F*n_lanes) weight ------
    # w_grp[kq][ci, r*C_out + co] = weight[ci, co, kq*stride + r]  (taps >= K are zero)
    w_full = jnp.pad(weight.astype(jnp.float32),
                     ((0, 0), (0, 0), (0, KQ * stride - K)))            # (C_in, C_out, KQ*s)
    w_grp = jnp.transpose(w_full.reshape(C_in, C_out, KQ, stride),
                          (2, 0, 3, 1)).reshape(KQ, C_in, n_lanes)      # (KQ, C_in, s*C_out)
    # Output row q = p*F + f draws input row p*F + s with s = f + (KQ-1-kq).
    w_big = jnp.zeros((W, C_in, F, n_lanes), jnp.float32)
    for f in range(F):
        for kq in range(KQ):
            s = f + (KQ - 1 - kq)
            w_big = w_big.at[s, :, f, :].set(w_grp[kq])
    w_big = w_big.reshape(WC, FN).astype(jnp.bfloat16)
    b_tiled = jnp.tile(bias.reshape(1, C_out).astype(jnp.float32), (1, F * stride))  # (1, FN)

    # ---- VMEM budget / compiler params --------------------------------------------------
    vmem_est = (2 * P_TILE * WC * 2          # x tiles (bf16, double buffered)
                + 2 * WC * FN * 2            # folded weights (bf16)
                + 2 * FN * 4                 # bias
                + 2 * P_TILE * FN * 2        # output tiles (bf16)
                + P_TILE * FN * 4)           # f32 accumulator
    try:
        cap = int(pltpu.get_tpu_info().vmem_capacity_bytes) * 3 // 4    # 96 MiB v5e/v6e, 48 MiB v7x
    except Exception:
        cap = 48 * 1024 * 1024
    vmem_limit = int(min(max(2 * vmem_est, 32 * 1024 * 1024), cap))

    cost = pl.CostEstimate(
        flops=2 * B * P_pad * WC * FN,
        transcendentals=0,
        bytes_accessed=(B * P_pad * WC * 2 + WC * FN * 2 + FN * 4 + B * P_pad * FN * 2),
    )

    o = pl.pallas_call(
        _convtr_kernel,
        out_shape=jax.ShapeDtypeStruct((B, P_pad, FN), jnp.bfloat16),
        grid_spec=pltpu.PrefetchScalarGridSpec(
            num_scalar_prefetch=0,
            grid=(B, NQ),
            in_specs=[
                pl.BlockSpec((None, P_TILE, WC), lambda b, j: (b, j, 0)),
                # TODO(synk): mark the two grid-invariant blocks below single-buffered
                # (pipeline_mode=pl.Buffered(1)) once verified on the target toolchain.
                pl.BlockSpec((WC, FN), lambda b, j: (0, 0)),
                pl.BlockSpec((1, FN), lambda b, j: (0, 0)),
            ],
            out_specs=pl.BlockSpec((None, P_TILE, FN), lambda b, j: (b, j, 0)),
        ),
        compiler_params=pltpu.CompilerParams(
            dimension_semantics=("parallel", "parallel"),
            vmem_limit_bytes=vmem_limit,
        ),
        cost_estimate=cost,
    )(x_im2col, w_big, b_tiled)

    # (B, P_pad, F*n_lanes) row-major == (B, q, r, co): reshape directly to time-major.
    y_full = o.reshape(B, Q_pad * stride, C_out)[:, :L_full, :]

    # unpad1d, exactly as in SConvTranspose1d.forward
    padding_total = K - stride
    if causal:
        padding_right = math.ceil(padding_total * trim_right_ratio)
        padding_left = padding_total - padding_right
    else:
        padding_right = padding_total // 2
        padding_left = padding_total - padding_right
    y = y_full[:, padding_left:L_full - padding_right, :]
    # TODO(synk): keep the decoder channels-last end-to-end to drop this NLC->NCL transpose.
    return jnp.transpose(y, (0, 2, 1)).astype(out_dtype)   # (B, C_out, L_out)


def _reference_numpy(x, w, b, stride, causal=False, trim_right_ratio=1.0):
    """Direct NumPy reference for ConvTranspose1d + unpad1d (for verification)."""
    B, C_in, L = x.shape
    _, C_out, K = w.shape
    L_full = (L - 1) * stride + K
    y = np.zeros((B, C_out, L_full), dtype=np.float64) + b[None, :, None]
    for l in range(L):
        for k in range(K):
            y[:, :, l * stride + k] += np.einsum("bi,io->bo", x[:, :, l], w[:, :, k])
    padding_total = K - stride
    if causal:
        padding_right = math.ceil(padding_total * trim_right_ratio)
        padding_left = padding_total - padding_right
    else:
        padding_right = padding_total // 2
        padding_left = padding_total - padding_right
    return y[:, :, padding_left: L_full - padding_right]


if __name__ == "__main__":
    # SConvTranspose1d(in_channels=4, out_channels=8, kernel_size=4, stride=2)
    B, C_in, C_out, L_in = 2, 4, 8, 16
    K, stride = 4, 2

    key = jax.random.PRNGKey(0)
    kx, kw, kb = jax.random.split(key, 3)
    x = jax.random.normal(kx, (B, C_in, L_in), dtype=jnp.float32)
    bound = 1.0 / math.sqrt(C_in * K)  # PyTorch-like uniform bound
    weight = jax.random.uniform(kw, (C_in, C_out, K), minval=-bound, maxval=bound,
                                dtype=jnp.float32)
    bias = jax.random.uniform(kb, (C_out,), minval=-bound, maxval=bound,
                              dtype=jnp.float32)

    # Reference uses bf16-rounded x / weight; kernel accumulates f32 and stores bf16,
    # so compare with tolerances covering the bf16 output rounding.
    x_bf = np.asarray(x.astype(jnp.bfloat16).astype(jnp.float32), dtype=np.float64)
    w_bf = np.asarray(weight.astype(jnp.bfloat16).astype(jnp.float32), dtype=np.float64)
    b_np = np.asarray(bias, dtype=np.float64)

    for causal, trr in ((False, 1.0), (True, 1.0)):
        y = sconv_transpose1d(x, weight, bias, stride=stride,
                              causal=causal, trim_right_ratio=trr)
        y = jax.block_until_ready(y)
        y_ref = _reference_numpy(x_bf, w_bf, b_np, stride,
                                 causal=causal, trim_right_ratio=trr)
        assert y.shape == y_ref.shape, (y.shape, y_ref.shape)
        np.testing.assert_allclose(np.asarray(y, dtype=np.float64), y_ref,
                                   rtol=1e-2, atol=1e-2)

    print("KERNEL_OK")
</pallas_src>

<mosaic_0001>
module attributes {stable_mosaic.version = 11 : i64} {
  func.func @_convtr_kernel(%arg0: i32, %arg1: i32, %arg2: memref<1x16x36xbf16, #tpu.memory_space<vmem>>, %arg3: memref<36x128xbf16, #tpu.memory_space<vmem>>, %arg4: memref<1x128xf32, #tpu.memory_space<vmem>>, %arg5: memref<1x16x128xbf16, #tpu.memory_space<vmem>>) attributes {dimension_semantics = [#tpu.dimension_semantics<parallel>, #tpu.dimension_semantics<parallel>], iteration_bounds = array<i64: 2, 1>, scalar_prefetch = 0 : i64, scratch_operands = 0 : i64, tpu.core_type = #tpu.core_type<tc>, window_params = [{transform_indices = @transform_0, window_bounds = array<i64: 1, 16, 36>}, {pipeline_mode = #tpu.pipeline_mode<synchronous>, transform_indices = @transform_1, window_bounds = array<i64: 36, 128>}, {pipeline_mode = #tpu.pipeline_mode<synchronous>, transform_indices = @transform_2, window_bounds = array<i64: 1, 128>}, {transform_indices = @transform_3, window_bounds = array<i64: 1, 16, 128>}]} {
    %c0 = arith.constant 0 : index
    %c0_0 = arith.constant 0 : index
    %c0_1 = arith.constant 0 : index
    %0 = vector.load %arg2[%c0, %c0_0, %c0_1] : memref<1x16x36xbf16, #tpu.memory_space<vmem>>, vector<1x16x36xbf16>
    %1 = vector.shape_cast %0 : vector<1x16x36xbf16> to vector<16x36xbf16>
    %c0_2 = arith.constant 0 : index
    %c0_3 = arith.constant 0 : index
    %2 = vector.load %arg3[%c0_2, %c0_3] : memref<36x128xbf16, #tpu.memory_space<vmem>>, vector<36x128xbf16>
    %cst = arith.constant dense<0.000000e+00> : vector<16x128xf32>
    %3 = tpu.matmul %1, %2, %cst {dimension_numbers = #tpu.dot_dimension_numbers<[1], [0], [0], [1], [0, 0, 1, 1], [], []>} : vector<16x36xbf16>, vector<36x128xbf16>, vector<16x128xf32> -> vector<16x128xf32>
    %c0_4 = arith.constant 0 : index
    %c0_5 = arith.constant 0 : index
    %4 = vector.load %arg4[%c0_4, %c0_5] : memref<1x128xf32, #tpu.memory_space<vmem>>, vector<1x128xf32>
    %5 = vector.broadcast %4 : vector<1x128xf32> to vector<16x128xf32>
    %6 = arith.addf %3, %5 : vector<16x128xf32>
    %7 = arith.truncf %6 : vector<16x128xf32> to vector<16x128xbf16>
    %c0_6 = arith.constant 0 : index
    %c0_7 = arith.constant 0 : index
    %c0_8 = arith.constant 0 : index
    %8 = vector.load %arg5[%c0_6, %c0_7, %c0_8] : memref<1x16x128xbf16, #tpu.memory_space<vmem>>, vector<1x16x128xbf16>
    %9 = vector.shape_cast %8 : vector<1x16x128xbf16> to vector<16x128xbf16>
    %10 = vector.shape_cast %7 : vector<16x128xbf16> to vector<1x16x128xbf16>
    tpu.vector_store %arg5[%c0_6, %c0_7, %c0_8], %10 {strides = array<i32>} : memref<1x16x128xbf16, #tpu.memory_space<vmem>>, vector<1x16x128xbf16>,
    return
  }
  func.func @transform_0(%arg0: i32, %arg1: i32) -> (i32, i32, i32) {
    %c0_i32 = arith.constant 0 : i32
    %c0_i32_0 = arith.constant 0 : i32
    return %arg0, %arg1, %c0_i32 : i32, i32, i32
  }
  func.func @transform_1(%arg0: i32, %arg1: i32) -> (i32, i32) {
    %c0_i32 = arith.constant 0 : i32
    %c0_i32_0 = arith.constant 0 : i32
    %c0_i32_1 = arith.constant 0 : i32
    return %c0_i32, %c0_i32_0 : i32, i32
  }
  func.func @transform_2(%arg0: i32, %arg1: i32) -> (i32, i32) {
    %c0_i32 = arith.constant 0 : i32
    %c0_i32_0 = arith.constant 0 : i32
    %c0_i32_1 = arith.constant 0 : i32
    return %c0_i32, %c0_i32_0 : i32, i32
  }
  func.func @transform_3(%arg0: i32, %arg1: i32) -> (i32, i32, i32) {
    %c0_i32 = arith.constant 0 : i32
    %c0_i32_0 = arith.constant 0 : i32
    return %arg0, %arg1, %c0_i32 : i32, i32, i32
  }
}

</mosaic_0001>

<llo_original>
// kernel: tpu_custom_call.1
$region0: #{tpu_custom_call.1}
  #allocation0 [shape = 'u32[]', space=smem, size = 0x4, offset = 0x4, fixed_abs, tag = 'smem constant byte address 0x4 - core index']
  #allocation1 [shape = 'u32[144,128]{1,0:T(1,128)}', space=vmem, size = 0x12000, scoped, tag = 'internal scratch']
  %s0 = inlined_call_operand.hbm [shape: bf16[2,16,36], index: 0, kind: input, shape index: {}]
  %s1 = inlined_call_operand.hbm [shape: bf16[36,128], index: 1, kind: input, shape index: {}]
  %s2 = inlined_call_operand.vmem [shape: f32[1,128], index: 2, kind: input, shape index: {}]
  %s3 = inlined_call_operand.hbm [shape: bf16[2,16,128], index: 3, kind: output, shape index: {}]
  %s4 = sld [smem:[#allocation0]]
  $region53: #{tpu_custom_call.1} parent=0
    _
  %s6 = ssub.s32 1, %s4
  %s7 = scalar_select 0, %s6, %s4
  $region1: #{tpu_custom_call.1} parent=0
    #allocation2 [shape = 'u8[8192]{0}', space=vmem, size = 0x2000, scoped, tag = 'input window, operand 0']
    #allocation3 [shape = 's32[2]{0}', space=sflag, size = 0x8, scoped, tag = 'scoped memory for tpu_custom_call.1']
    #allocation4 [shape = 's32[2]{0}', space=sflag, size = 0x8, scoped, tag = 'scoped memory for tpu_custom_call.1']
    #allocation5 [shape = 'u8[10240]{0}', space=vmem, size = 0x2800, scoped, tag = 'input window, operand 1, single buffered']
    #allocation6 [shape = 's32[1]{0}', space=sflag, size = 0x4, scoped, tag = 'scoped memory for tpu_custom_call.1']
    #allocation7 [shape = 'u8[8192]{0}', space=vmem, size = 0x2000, scoped, tag = 'output window, operand 0']
    %8 = vsyncpa [#allocation3], 0
    %s9 = scalar_lea.sflag [#allocation3], 1
    %10 = vsyncpa %s9, 0
    %11 = vsyncpa [#allocation6], 0
    %12 = vsyncpa [#allocation4], 0
    %s13 = scalar_lea.sflag [#allocation4], 1
    %14 = vsyncpa %s13, 0
    loop: start=0, step=1, limit=4
    $region2: #{tpu_custom_call.1} parent=1 // loop_pre_header
      _
    $region3: #{tpu_custom_call.1} parent=1 // loop_header
      %s16 = sphi 0, %s20
      %p17 = scmp.ge.s32.totalorder %s16, 4
      %s23 = sphi 0, %s35
      %s24 = sphi 0, %s31
      %s25 = sphi 0, %s23
      %s26 = sphi 0, %s24
      %s27 = sphi 0, %s25
      %s28 = sphi 0, %s26
      %s40 = sphi 0, %s42
      %s43 = sphi 0, %s40
      %s44 = sphi 0, %s43
      %s60 = sphi 0, %s44
      %s64 = sphi 0, %s64
      %s66 = sphi 0, %s64
      %s67 = sphi 0, %s66
      %s81 = sphi 0, %s67
      %s85 = sphi 0, %s85
      %s87 = sphi 0, %s85
      %s88 = sphi 0, %s87
      %s102 = sphi 0, %s88
      %s110 = sphi 0, %s112
      %s113 = sphi 0, %s110
      %s114 = sphi 0, %s113
      %s130 = sphi 0, %s114
    $region4: #{tpu_custom_call.1} parent=1 // loop_header_branch
      %19 = sbr.rel (%p17) target = $region8
    $region5: #{tpu_custom_call.1} parent=1 // loop_body
      %s21 = ssub.s32 %s16, 1
      %s22 = ssub.s32 %s16, 2
      %s29 = sadd.s32 1, %s24
      %p30 = scmp.ge.s32.totalorder %s29, 1
      %s31 = scalar_select %p30, 0, %s29
      %s32 = sadd.s32 1, %s23
      %s33 = scalar_select %p30, %s32, %s23
      %p34 = scmp.ge.s32.totalorder %s33, 2
      %s35 = scalar_select %p34, 0, %s33
      %s36 = ssub.s32 %s23, %s35
      %s37 = ssub.s32 %s24, %s31
      %s38 = sor.u32 %s36, %s37
      %p39 = scmp.eq.s32.totalorder %s38, 0
      %s41 = sadd.s32 %s40, 1
      %s42 = scalar_select %p39, %s40, %s41
      %p45 = pneg %p39
      %p46 = scmp.eq.s32.totalorder %s16, 1
      %p47 = por %p45, %p46
      %p48 = scmp.ne.s32.totalorder %s40, %s43
      %p49 = scmp.eq.s32.totalorder %s16, 0
      %p50 = por %p48, %p49
      %p51 = scmp.ne.s32.totalorder %s40, %s43
      %p52 = scmp.eq.s32.totalorder %s21, 1
      %p53 = por %p51, %p52
      %p54 = scmp.ne.s32.totalorder %s43, %s44
      %p55 = scmp.eq.s32.totalorder %s21, 0
      %p56 = por %p54, %p55
      %p57 = scmp.ne.s32.totalorder %s43, %s44
      %p58 = scmp.eq.s32.totalorder %s22, 1
      %p59 = por %p57, %p58
      %p61 = scmp.ne.s32.totalorder %s44, %s60
      %p62 = scmp.eq.s32.totalorder %s22, 0
      %p63 = por %p61, %p62
      %s65 = sadd.s32 %s64, 1
      %p68 = scmp.eq.s32.totalorder %s16, 1
      %p69 = scmp.ne.s32.totalorder %s64, %s66
      %p70 = scmp.eq.s32.totalorder %s16, 0
      %p71 = por %p69, %p70
      %p72 = scmp.ne.s32.totalorder %s64, %s66
      %p73 = scmp.eq.s32.totalorder %s21, 1
      %p74 = por %p72, %p73
      %p75 = scmp.ne.s32.totalorder %s66, %s67
      %p76 = scmp.eq.s32.totalorder %s21, 0
      %p77 = por %p75, %p76
      %p78 = scmp.ne.s32.totalorder %s66, %s67
      %p79 = scmp.eq.s32.totalorder %s22, 1
      %p80 = por %p78, %p79
      %p82 = scmp.ne.s32.totalorder %s67, %s81
      %p83 = scmp.eq.s32.totalorder %s22, 0
      %p84 = por %p82, %p83
      %s86 = sadd.s32 %s85, 1
      %p89 = scmp.eq.s32.totalorder %s16, 1
      %p90 = scmp.ne.s32.totalorder %s85, %s87
      %p91 = scmp.eq.s32.totalorder %s16, 0
      %p92 = por %p90, %p91
      %p93 = scmp.ne.s32.totalorder %s85, %s87
      %p94 = scmp.eq.s32.totalorder %s21, 1
      %p95 = por %p93, %p94
      %p96 = scmp.ne.s32.totalorder %s87, %s88
      %p97 = scmp.eq.s32.totalorder %s21, 0
      %p98 = por %p96, %p97
      %p99 = scmp.ne.s32.totalorder %s87, %s88
      %p100 = scmp.eq.s32.totalorder %s22, 1
      %p101 = por %p99, %p100
      %p103 = scmp.ne.s32.totalorder %s88, %s102
      %p104 = scmp.eq.s32.totalorder %s22, 0
      %p105 = por %p103, %p104
      %s106 = ssub.s32 %s23, %s35
      %s107 = ssub.s32 %s24, %s31
      %s108 = sor.u32 %s106, %s107
      %p109 = scmp.eq.s32.totalorder %s108, 0
      %s111 = sadd.s32 %s110, 1
      %s112 = scalar_select %p109, %s110, %s111
      %p115 = pneg %p109
      %p116 = scmp.eq.s32.totalorder %s16, 1
      %p117 = por %p115, %p116
      %p118 = scmp.ne.s32.totalorder %s110, %s113
      %p119 = scmp.eq.s32.totalorder %s16, 0
      %p120 = por %p118, %p119
      %p121 = scmp.ne.s32.totalorder %s110, %s113
      %p122 = scmp.eq.s32.totalorder %s21, 1
      %p123 = por %p121, %p122
      %p124 = scmp.ne.s32.totalorder %s113, %s114
      %p125 = scmp.eq.s32.totalorder %s21, 0
      %p126 = por %p124, %p125
      %p127 = scmp.ne.s32.totalorder %s113, %s114
      %p128 = scmp.eq.s32.totalorder %s22, 1
      %p129 = por %p127, %p128
      %p131 = scmp.ne.s32.totalorder %s114, %s130
      %p132 = scmp.eq.s32.totalorder %s22, 0
      %p133 = por %p131, %p132
      %p134 = scmp.le.s32.totalorder 1, %s16
      %p135 = scmp.lt.s32.totalorder %s16, 3
      %p136 = pnand %p134, %p135
      %p137 = pneg %p136
      // Predicated region
      $region9: #{tpu_custom_call.1} parent=5 // pred_check
        _
      $region10: #{tpu_custom_call.1} parent=5 // pred_check_branch
        %139 = sbr.rel (%p136) target = $region12
      $region11: #{tpu_custom_call.1} parent=5 // pred_region
        %s140 = ssub.s32 %s16, 1
        // Predicated region
        $region13: #{tpu_custom_call.1} parent=11 // pred_check
          %p141 = pneg %p77
        $region14: #{tpu_custom_call.1} parent=11 // pred_check_branch
          %143 = sbr.rel (%p141) target = $region16
        $region15: #{tpu_custom_call.1} parent=11 // pred_region
          %s145 = ssub.s32 320, 320
          %146 = vsyncadd [#allocation6], %s145
          %s147 = sshll.u32 [#allocation5], 4
          %s148 = int_to_ptr.vmem [resolvable:$true] %s147
          %153 = dma.hbm_to_vmem [thread:$0]  %s1, 320, %s148, [#allocation6], 64, 64, 4
        $region16: #{tpu_custom_call.1} parent=11 // pred_fallthru
          _
        // Predicated region
        $region17: #{tpu_custom_call.1} parent=11 // pred_check
          %p154 = pneg %p98
        $region18: #{tpu_custom_call.1} parent=11 // pred_check_branch
          %156 = sbr.rel (%p154) target = $region20
        $region19: #{tpu_custom_call.1} parent=11 // pred_region
          _
        $region20: #{tpu_custom_call.1} parent=11 // pred_fallthru
          _
      $region12: #{tpu_custom_call.1} parent=5 // pred_fallthru
        _
      %p157 = scmp.lt.s32.totalorder %s16, 2
      // Predicated region
      $region21: #{tpu_custom_call.1} parent=5 // pred_check
        %p158 = pneg %p157
      $region22: #{tpu_custom_call.1} parent=5 // pred_check_branch
        %160 = sbr.rel (%p158) target = $region24
      $region23: #{tpu_custom_call.1} parent=5 // pred_region
        // Predicated region
        $region25: #{tpu_custom_call.1} parent=23 // pred_check
          %p161 = pneg %p50
        $region26: #{tpu_custom_call.1} parent=23 // pred_check_branch
          %163 = sbr.rel (%p161) target = $region28
        $region27: #{tpu_custom_call.1} parent=23 // pred_region
          %s164 = sand.u32 %s40, 1
          %s165 = scalar_lea.sflag [#allocation3], %s164
          %s166 = sand.u32 %s40, 1
          %s167 = smul.addr %s166, 8
          %s168 = scalar_lea.vmem [#allocation2], %s167
          %s169 = smul.u32 2, %s24
          %s171 = ssub.s32 128, 128
          %172 = vsyncadd %s165, %s171
          %s173 = smul.addr %s23, 2
          %s174 = sadd.s32 %s169, %s173
          %s175 = smul.addr %s174, 64
          %s176 = scalar_lea.hbm %s0, %s175
          %s177 = sshll.u32 %s168, 4
          %s178 = int_to_ptr.vmem [resolvable:$true] %s177
          %183 = dma.hbm_to_vmem [thread:$0]  %s176, 128, %s178, %s165, 64, 64, 4
        $region28: #{tpu_custom_call.1} parent=23 // pred_fallthru
          _
      $region24: #{tpu_custom_call.1} parent=5 // pred_fallthru
        _
      %p184 = scmp.le.s32.totalorder 1, %s16
      %p185 = scmp.lt.s32.totalorder %s16, 3
      %p186 = pnand %p184, %p185
      %p187 = pneg %p186
      // Predicated region
      $region29: #{tpu_custom_call.1} parent=5 // pred_check
        _
      $region30: #{tpu_custom_call.1} parent=5 // pred_check_branch
        %189 = sbr.rel (%p186) target = $region32
      $region31: #{tpu_custom_call.1} parent=5 // pred_region
        %s190 = ssub.s32 %s16, 1
        %s191 = sand.u32 %s43, 1
        %s192 = scalar_lea.sflag [#allocation3], %s191
        %s193 = sand.u32 %s43, 1
        %s194 = smul.addr %s193, 8
        %s195 = scalar_lea.vmem [#allocation2], %s194
        // Predicated region
        $region33: #{tpu_custom_call.1} parent=31 // pred_check
          %p196 = pneg %p56
        $region34: #{tpu_custom_call.1} parent=31 // pred_check_branch
          %198 = sbr.rel (%p196) target = $region36
        $region35: #{tpu_custom_call.1} parent=31 // pred_region
          %199 = dma.done %s192, 128
        $region36: #{tpu_custom_call.1} parent=31 // pred_fallthru
          _
        // Predicated region
        $region37: #{tpu_custom_call.1} parent=31 // pred_check
          %p200 = pneg %p77
        $region38: #{tpu_custom_call.1} parent=31 // pred_check_branch
          %202 = sbr.rel (%p200) target = $region40
        $region39: #{tpu_custom_call.1} parent=31 // pred_region
          %203 = dma.done [#allocation6], 320
        $region40: #{tpu_custom_call.1} parent=31 // pred_fallthru
          _
        %s204 = sand.u32 %s43, 1
        %s205 = scalar_lea.sflag [#allocation3], %s204
        %s206 = sand.u32 %s43, 1
        %s207 = smul.addr %s206, 8
        %s208 = scalar_lea.vmem [#allocation2], %s207
        %p209 = pneg %p56
        %p210 = pneg %p53
        %p211 = pneg %p77
        %p212 = pneg %p74
        %p213 = pneg %p98
        %p214 = pneg %p95
        %p215 = pneg %p126
        %p216 = pneg %p123
        %s217 = sand.u32 %s113, 1
        %s218 = scalar_lea.sflag [#allocation4], %s217
        %s219 = sand.u32 %s113, 1
        %s220 = smul.addr %s219, 8
        %s221 = scalar_lea.vmem [#allocation7], %s220
        %s222 = smul.u32 2, %s26
        %s223 = smul.u32 2, %s26
        %v225 = vld [vmem:[%s195] sm:$0xf]
        %v226 = vld [vmem:[%s195 + $0x4] sm:$0xf]
        %v227 = vld [vmem:[#allocation5] sm:$0xf]
        %v228 = vld [vmem:[#allocation5 + $0x4] sm:$0xf]
        %v229 = vld [vmem:[#allocation5 + $0x8] sm:$0xf]
        %v230 = vld [vmem:[#allocation5 + $0xc] sm:$0xf]
        %v231 = vld [vmem:[#allocation5 + $0x10] sm:$0x3]
        %v232 = vld [vmem:[%s2] sm:$0x1]
        %v234 = vlaneseq
        %v235 = vshrl.u32 %v234, 7
        %v236 = vsub.s32 0, %v235
        %v237 = vrot.slane %v232, %v236
        %v241 = vunpack.c.l.b16 %v225
        %v242 = vunpack.c.l.b16 %v226
        %v243 = vpack.c.b16 %v242, %v241
        %v249 = vunpack.c.l.b16 %v227
        %v250 = vunpack.c.l.b16 %v228
        %v251 = vunpack.c.l.b16 %v229
        %v252 = vunpack.c.l.b16 %v230
        %v253 = vunpack.c.l.b16 %v231
        %v254 = vpack.c.b16 %v250, %v249
        %v255 = vpack.c.b16 %v252, %v251
        %v256 = vpack.c.b16 %v253, %v253
        %vm259 = vcmask 293888
        %v261 = vsel %vm259, %v243, 0
        %vm263 = vcmask 1041408
        %v265 = vsel %vm263, %v256, 0
        %267 = vmatprep.subr.bf16.mxu0 0
        %268 = vmatpush1.bf16.msra.mxu0 %v254
        %269 = vmatprep.subr.bf16.mxu0 0
        %270 = vmatpush1.bf16.msra.mxu0 %v255
        %271 = vmatprep.subr.bf16.mxu0 0
        %272 = vmatpush1.bf16.msra.mxu0 %v265
        %273 = vmatprep.subr.bf16.mxu0 0
        %274 = vmatpush1.bf16.msra.mxu0 0
        %275 = vmatprep.subr.bf16.mxu0 0
        %276 = vmatpush1.bf16.msra.mxu0 0
        %277 = vmatprep.subr.bf16.mxu0 0
        %278 = vmatpush1.bf16.msra.mxu0 0
        %279 = vmatprep.subr.bf16.mxu0 0
        %280 = vmatpush1.bf16.msra.mxu0 0
        %281 = vmatprep.subr.bf16.mxu0 0
        %282 = vmatpush1.bf16.msra.mxu0 0
        %283 = vmatprep.subr.bf16.mxu0 0
        %284 = vmatpush1.bf16.msra.mxu0 0
        %285 = vmatprep.subr.bf16.mxu0 0
        %286 = vmatpush1.bf16.msra.mxu0 0
        %287 = vmatprep.subr.bf16.mxu0 0
        %288 = vmatpush1.bf16.msra.mxu0 0
        %289 = vmatprep.subr.bf16.mxu0 0
        %290 = vmatpush1.bf16.msra.mxu0 0
        %291 = vmatprep.subr.bf16.mxu0 0
        %292 = vmatpush1.bf16.msra.mxu0 0
        %293 = vmatprep.subr.bf16.mxu0 0
        %294 = vmatpush1.bf16.msra.mxu0 0
        %295 = vmatprep.subr.bf16.mxu0 0
        %296 = vmatpush1.bf16.msra.mxu0 0
        %297 = vmatprep.subr.bf16.mxu0 0
        %298 = vmatpush1.bf16.msra.mxu0 0
        %299 = vmatprep.mubr.bf16.mxu0 0
        %300 = vmatmul.mubr.bf16.gmra.mrb[0].mxu0 %v261
        %v301 = vpop.f32.mrb[0].mxu0
        %v302 = vadd.f32 %v237, %v301
        %v303 = vpop.f32.mrb[0].mxu0
        %v304 = vpop.f32.mrb[0].mxu0
        %v305 = vadd.f32 %v237, %v304
        %v306 = vpop.f32.mrb[0].mxu0
        %307 = vdwg.mxu0
        %v308 = vpack.c.bf16 %v305, %v302
        %v310 = vunpack.c.l.b16 %v308
        %v311 = vunpack.c.h.b16 %v308
        %v312 = vpack.c.b16 %v310, %v310
        %v313 = vpack.c.b16 %v311, %v311
        %316 = vst [vmem:[%s221] sm:$0xf] %v312
        %317 = vst [vmem:[%s221 + $0x4] sm:$0xf] %v313
        %s318 = sand.u32 %s113, 1
        %s319 = scalar_lea.sflag [#allocation4], %s318
        %s320 = sand.u32 %s113, 1
        %s321 = smul.addr %s320, 8
        %s322 = scalar_lea.vmem [#allocation7], %s321
        // Predicated region
        $region41: #{tpu_custom_call.1} parent=31 // pred_check
          %p323 = pneg %p123
        $region42: #{tpu_custom_call.1} parent=31 // pred_check_branch
          %325 = sbr.rel (%p323) target = $region44
        $region43: #{tpu_custom_call.1} parent=31 // pred_region
          %s326 = smul.u32 2, %s26
          %s328 = ssub.s32 128, 128
          %329 = vsyncadd %s319, %s328
          %s330 = smul.addr %s25, 2
          %s331 = sadd.s32 %s326, %s330
          %s332 = smul.addr %s331, 64
          %s333 = scalar_lea.hbm %s3, %s332
          %s334 = sshll.u32 %s322, 4
          %s335 = int_to_ptr.vmem [resolvable:$true] %s334
          %340 = dma.vmem_to_hbm [thread:$0]  %s335, 128, %s333, %s319, 64, 64, 4
        $region44: #{tpu_custom_call.1} parent=31 // pred_fallthru
          _
      $region32: #{tpu_custom_call.1} parent=5 // pred_fallthru
        _
      %p341 = scmp.le.s32.totalorder 2, %s16
      // Predicated region
      $region45: #{tpu_custom_call.1} parent=5 // pred_check
        %p342 = pneg %p341
      $region46: #{tpu_custom_call.1} parent=5 // pred_check_branch
        %344 = sbr.rel (%p342) target = $region48
      $region47: #{tpu_custom_call.1} parent=5 // pred_region
        %s345 = ssub.s32 %s16, 2
        // Predicated region
        $region49: #{tpu_custom_call.1} parent=47 // pred_check
          %p346 = pneg %p129
        $region50: #{tpu_custom_call.1} parent=47 // pred_check_branch
          %348 = sbr.rel (%p346) target = $region52
        $region51: #{tpu_custom_call.1} parent=47 // pred_region
          %s349 = sand.u32 %s114, 1
          %s350 = scalar_lea.sflag [#allocation4], %s349
          %s351 = sand.u32 %s114, 1
          %s352 = smul.addr %s351, 8
          %s353 = scalar_lea.vmem [#allocation7], %s352
          %354 = dma.done %s350, 128
        $region52: #{tpu_custom_call.1} parent=47 // pred_fallthru
          _
      $region48: #{tpu_custom_call.1} parent=5 // pred_fallthru
        _
    $region6: #{tpu_custom_call.1} parent=1 // loop_footer
      %s20 = sadd.s32 1, %s16
    $region7: #{tpu_custom_call.1} parent=1 // loop_footer_branch
      %15 = sbr.rel target = $region3
    $region8: #{tpu_custom_call.1} parent=1 // loop_exit
      _
    %355 = vsyncpa [#allocation3], 1
    %s356 = scalar_lea.sflag [#allocation3], 1
    %357 = vsyncpa %s356, 1
    %358 = vsyncpa [#allocation6], 1
    %359 = vsyncpa [#allocation4], 1
    %s360 = scalar_lea.sflag [#allocation4], 1
    %361 = vsyncpa %s360, 1

</llo_original>
